<compile_context>
chip_gen: v7x
topology: tpu7x:2x2x1
jax: 0.10.0
libtpu: 0.0.40
codegen_flags: <defaults>
</compile_context>

<pallas_src>
import functools
import math

import jax
import jax.numpy as jnp
import numpy as np
from jax import lax
from jax.experimental import pallas as pl
from jax.experimental.pallas import tpu as pltpu


def _ce_kernel(logits_ref, labels_ref, loss_ref, cnt_ref, sum_ref, *,
               ignore_lb: int, hw: int, tile: int, thresh_val: float):
    """Per-pixel cross entropy + fused OHEM threshold statistics.

    Blocks:
      logits_ref : (1, C, T)   native dtype (upcast to f32 in VMEM)
      labels_ref : (1, 1, T)   integer labels (cast to i32 in VMEM)
      loss_ref   : (1, 1, T)   f32 per-pixel loss (ignored / tail pixels -> 0)
      cnt_ref    : (1, 1, 128) f32; lane 0 = count(loss > thresh), rest 0
      sum_ref    : (1, 1, 128) f32; lane 0 = sum(loss where > thresh), rest 0
    """
    p = pl.program_id(1)

    x = logits_ref[0].astype(jnp.float32)       # (C, T)
    lab = labels_ref[0].astype(jnp.int32)       # (1, T)

    # log-softmax pieces via sublane reductions over the class axis.
    m = jnp.max(x, axis=0, keepdims=True)                              # (1, T)
    s = jnp.sum(jnp.exp(x - m), axis=0, keepdims=True)                 # (1, T)
    cls = lax.broadcasted_iota(jnp.int32, x.shape, 0)                  # (C, T)
    picked = jnp.sum(jnp.where(cls == lab, x, 0.0), axis=0, keepdims=True)
    loss = (jnp.log(s) + m) - picked                                   # -log p(label)
    # NOTE: labels outside [0, C) that are not ignore_lb give picked = 0, i.e.
    # loss = logsumexp(x), instead of raising like PyTorch's NLLLoss.

    # Mask ignored labels and the ragged tail (global pixel index >= HW).
    lane = lax.broadcasted_iota(jnp.int32, (1, tile), 1)
    valid = (p * tile + lane) < hw
    lm = jnp.where(valid & (lab != ignore_lb), loss, 0.0)
    loss_ref[0] = lm

    # Fused threshold statistics: cross-lane reduce to a (1,1) partial per
    # grid step, written into lane 0 of a lane-dense 128-wide output slab
    # (XLA finishes the tiny reduction over the slabs).
    sel = lm > thresh_val
    cnt_val = jnp.sum(jnp.where(sel, 1.0, 0.0), axis=1, keepdims=True)   # (1, 1)
    sum_val = jnp.sum(jnp.where(sel, lm, 0.0), axis=1, keepdims=True)    # (1, 1)
    lane128 = lax.broadcasted_iota(jnp.int32, (1, 128), 1)
    cnt_ref[0] = jnp.where(lane128 == 0, cnt_val, 0.0)
    sum_ref[0] = jnp.where(lane128 == 0, sum_val, 0.0)


def _pick_tile(hw, n, c, logit_bytes, label_bytes,
               vmem_budget_bytes=16 * 1024 * 1024):
    """Largest multiple-of-128 pixel tile that fits the VMEM budget."""
    # Double-buffered bytes per pixel: logits + labels in, f32 loss out.
    per_pix = 2 * (c * logit_bytes + label_bytes + 4)
    tile = max(128, min(32768, vmem_budget_bytes // per_pix))
    tile = (tile // 128) * 128
    # Never exceed the (rounded-up) pixel count.
    tile = min(tile, pl.cdiv(hw, 128) * 128)
    # Megacore balance (v7x has 2 TensorCores): keep >= ~8 grid steps when the
    # input is big enough to care; don't shrink below 1024.
    while tile > 1024 and n * pl.cdiv(hw, tile) < 8:
        tile = max(1024, ((tile // 2) // 128) * 128)
    return tile


def _per_pixel_ce(logits_nchw, labels, thresh_val, ignore_lb=255, tile=None):
    """Per-pixel CE plus fused OHEM threshold stats.

    Returns (loss_flat (N*H*W,) f32, cnt int32, sum_gt f32) where
    cnt = #(loss > thresh_val) and sum_gt = sum of those losses.
    """
    N, C, H, W = logits_nchw.shape
    HW = H * W
    if tile is None:
        tile = _pick_tile(HW, N, C, logits_nchw.dtype.itemsize,
                          labels.dtype.itemsize)
    n_p = pl.cdiv(HW, tile)

    # Free reshapes only -- no transpose, no pad, no dtype copy in HBM.
    # Labels keep their source dtype; cast happens in VMEM inside the kernel.
    x = logits_nchw.reshape(N, C, HW)
    lab = labels.reshape(N, 1, HW)

    loss, cnt128, sum128 = pl.pallas_call(
        functools.partial(_ce_kernel, ignore_lb=ignore_lb, hw=HW, tile=tile,
                          thresh_val=thresh_val),
        out_shape=(
            jax.ShapeDtypeStruct((N, 1, HW), jnp.float32),
            jax.ShapeDtypeStruct((N, 1, n_p * 128), jnp.float32),
            jax.ShapeDtypeStruct((N, 1, n_p * 128), jnp.float32),
        ),
        grid=(N, n_p),
        in_specs=[
            pl.BlockSpec((1, C, tile), lambda n, p: (n, 0, p)),   # logits block
            pl.BlockSpec((1, 1, tile), lambda n, p: (n, 0, p)),   # labels block
        ],
        out_specs=(
            pl.BlockSpec((1, 1, tile), lambda n, p: (n, 0, p)),   # per-pixel loss
            pl.BlockSpec((1, 1, 128), lambda n, p: (n, 0, p)),    # count partials
            pl.BlockSpec((1, 1, 128), lambda n, p: (n, 0, p)),    # sum partials
        ),
        compiler_params=pltpu.CompilerParams(
            # Both axes independent -> megacore sharding on v7x's 2 TCs.
            dimension_semantics=("parallel", "parallel"),
            vmem_limit_bytes=32 * 1024 * 1024),
    )(x, lab)

    # Per-step counts are small exact integers in f32; finish exactly in i32.
    cnt = jnp.sum(cnt128.astype(jnp.int32))
    sum_gt = jnp.sum(sum128)
    return loss.reshape(N * HW), cnt, sum_gt


def ohem_ce_loss(logits, labels, thresh, n_min, ignore_lb=255):
    """Exact forward semantics of the PyTorch OhemCELoss module."""
    thresh_val = float(-math.log(thresh))
    loss, cnt, sum_gt = _per_pixel_ce(logits, labels, thresh_val,
                                      ignore_lb=ignore_lb)

    # sorted_loss[n_min] > thresh  <=>  count(loss > thresh) > n_min.
    cond = cnt > n_min

    def mean_gt(_):
        return sum_gt / jnp.maximum(cnt, 1).astype(jnp.float32)

    def mean_topk(_):
        # Only executed when the threshold branch is not taken.
        # TODO(synk): replace the O(P log P) top_k sort with a histogram
        # rank-selection if this fallback branch is ever hot.
        return jnp.mean(lax.top_k(loss, n_min)[0])

    return lax.cond(cond, mean_gt, mean_topk, 0)


def _ref_ohem(logits, labels, thresh, n_min, ignore_lb=255):
    """Pure-JAX reference mirroring the PyTorch module."""
    N, C, H, W = logits.shape
    x = jnp.transpose(logits, (0, 2, 3, 1)).reshape(-1, C).astype(jnp.float32)
    lab = labels.reshape(-1)
    logp = jax.nn.log_softmax(x, axis=-1)
    picked = jnp.take_along_axis(logp, jnp.clip(lab, 0, C - 1)[:, None], axis=-1)[:, 0]
    loss = jnp.where(lab == ignore_lb, 0.0, -picked)
    sorted_loss = jnp.sort(loss)[::-1]
    thresh_val = jnp.float32(-math.log(thresh))
    cond = sorted_loss[n_min] > thresh_val
    gt = loss > thresh_val
    mean_gt = jnp.sum(jnp.where(gt, loss, 0.0)) / jnp.maximum(jnp.sum(gt), 1).astype(jnp.float32)
    mean_topk = jnp.mean(sorted_loss[:n_min])
    return jnp.where(cond, mean_gt, mean_topk)


if __name__ == "__main__":
    key = jax.random.PRNGKey(0)
    k_logits, k_labels, k_ignore = jax.random.split(key, 3)

    N, C, H, W = 2, 4, 16, 16
    thresh = 0.7
    n_min = (N * H * W) // 8          # 64
    ignore_lb = 255

    logits = jax.random.normal(k_logits, (N, C, H, W), dtype=jnp.float32) * 2.0
    labels = jax.random.randint(k_labels, (N, H, W), 0, C, dtype=jnp.int32)
    # sprinkle some ignored pixels
    ign_mask = jax.random.uniform(k_ignore, (N, H, W)) < 0.1
    labels = jnp.where(ign_mask, ignore_lb, labels)

    fn = jax.jit(functools.partial(ohem_ce_loss, thresh=thresh, n_min=n_min,
                                   ignore_lb=ignore_lb))
    out = jax.block_until_ready(fn(logits, labels))

    ref = jax.block_until_ready(_ref_ohem(logits, labels, thresh, n_min, ignore_lb))
    np.testing.assert_allclose(np.asarray(out), np.asarray(ref), rtol=1e-5, atol=1e-5)

    print("KERNEL_OK")
</pallas_src>

<mosaic_0001>
module attributes {stable_mosaic.version = 11 : i64} {
  func.func @_ce_kernel(%arg0: i32, %arg1: i32, %arg2: memref<1x4x256xf32, #tpu.memory_space<vmem>>, %arg3: memref<1x1x256xi32, #tpu.memory_space<vmem>>, %arg4: memref<1x1x256xf32, #tpu.memory_space<vmem>>, %arg5: memref<1x1x128xf32, #tpu.memory_space<vmem>>, %arg6: memref<1x1x128xf32, #tpu.memory_space<vmem>>) attributes {dimension_semantics = [#tpu.dimension_semantics<parallel>, #tpu.dimension_semantics<parallel>], iteration_bounds = array<i64: 2, 1>, scalar_prefetch = 0 : i64, scratch_operands = 0 : i64, tpu.core_type = #tpu.core_type<tc>, window_params = [{transform_indices = @transform_0, window_bounds = array<i64: 1, 4, 256>}, {transform_indices = @transform_1, window_bounds = array<i64: 1, 1, 256>}, {transform_indices = @transform_2, window_bounds = array<i64: 1, 1, 256>}, {transform_indices = @transform_3, window_bounds = array<i64: 1, 1, 128>}, {transform_indices = @transform_4, window_bounds = array<i64: 1, 1, 128>}]} {
    %c0 = arith.constant 0 : index
    %c0_0 = arith.constant 0 : index
    %c0_1 = arith.constant 0 : index
    %0 = vector.load %arg2[%c0, %c0_0, %c0_1] : memref<1x4x256xf32, #tpu.memory_space<vmem>>, vector<1x4x256xf32>
    %1 = vector.shape_cast %0 : vector<1x4x256xf32> to vector<4x256xf32>
    %c0_2 = arith.constant 0 : index
    %c0_3 = arith.constant 0 : index
    %c0_4 = arith.constant 0 : index
    %2 = vector.load %arg3[%c0_2, %c0_3, %c0_4] : memref<1x1x256xi32, #tpu.memory_space<vmem>>, vector<1x1x256xi32>
    %3 = vector.shape_cast %2 : vector<1x1x256xi32> to vector<1x256xi32>
    %cst = arith.constant dense<0xFF800000> : vector<256xf32>
    %4 = vector.multi_reduction <maximumf>, %1, %cst [0] : vector<4x256xf32> to vector<256xf32>
    %5 = vector.shape_cast %4 : vector<256xf32> to vector<1x256xf32>
    %6 = vector.broadcast %5 : vector<1x256xf32> to vector<4x256xf32>
    %7 = arith.subf %1, %6 : vector<4x256xf32>
    %8 = math.exp %7 : vector<4x256xf32>
    %cst_5 = arith.constant dense<0.000000e+00> : vector<256xf32>
    %9 = vector.multi_reduction <add>, %8, %cst_5 [0] : vector<4x256xf32> to vector<256xf32>
    %10 = vector.shape_cast %9 : vector<256xf32> to vector<1x256xf32>
    %11 = tpu.iota {dimensions = array<i32: 0>} : vector<4x256xi32>
    %12 = vector.broadcast %3 : vector<1x256xi32> to vector<4x256xi32>
    %13 = arith.cmpi eq, %11, %12 : vector<4x256xi32>
    %cst_6 = arith.constant 0.000000e+00 : f32
    %14 = vector.broadcast %cst_6 : f32 to vector<4x256xf32>
    %15 = arith.select %13, %1, %14 : vector<4x256xi1>, vector<4x256xf32>
    %cst_7 = arith.constant dense<0.000000e+00> : vector<256xf32>
    %16 = vector.multi_reduction <add>, %15, %cst_7 [0] : vector<4x256xf32> to vector<256xf32>
    %17 = vector.shape_cast %16 : vector<256xf32> to vector<1x256xf32>
    %18 = math.log %10 : vector<1x256xf32>
    %19 = arith.addf %18, %5 : vector<1x256xf32>
    %20 = arith.subf %19, %17 : vector<1x256xf32>
    %21 = tpu.iota {dimensions = array<i32: 1>} : vector<1x256xi32>
    %c256_i32 = arith.constant 256 : i32
    %22 = arith.muli %arg1, %c256_i32 : i32
    %23 = vector.broadcast %22 : i32 to vector<1x256xi32>
    %24 = arith.addi %23, %21 : vector<1x256xi32>
    %c256_i32_8 = arith.constant 256 : i32
    %25 = vector.broadcast %c256_i32_8 : i32 to vector<1x256xi32>
    %26 = arith.cmpi slt, %24, %25 : vector<1x256xi32>
    %c255_i32 = arith.constant 255 : i32
    %27 = vector.broadcast %c255_i32 : i32 to vector<1x256xi32>
    %28 = arith.cmpi ne, %3, %27 : vector<1x256xi32>
    %29 = arith.andi %26, %28 : vector<1x256xi1>
    %cst_9 = arith.constant 0.000000e+00 : f32
    %30 = vector.broadcast %cst_9 : f32 to vector<1x256xf32>
    %31 = arith.select %29, %20, %30 : vector<1x256xi1>, vector<1x256xf32>
    %c0_10 = arith.constant 0 : index
    %c0_11 = arith.constant 0 : index
    %c0_12 = arith.constant 0 : index
    %32 = vector.load %arg4[%c0_10, %c0_11, %c0_12] : memref<1x1x256xf32, #tpu.memory_space<vmem>>, vector<1x1x256xf32>
    %33 = vector.shape_cast %32 : vector<1x1x256xf32> to vector<1x256xf32>
    %34 = vector.shape_cast %31 : vector<1x256xf32> to vector<1x1x256xf32>
    tpu.vector_store %arg4[%c0_10, %c0_11, %c0_12], %34 {strides = array<i32>} : memref<1x1x256xf32, #tpu.memory_space<vmem>>, vector<1x1x256xf32>,
    %cst_13 = arith.constant 0.356674939 : f32
    %35 = vector.broadcast %cst_13 : f32 to vector<1x256xf32>
    %36 = arith.cmpf ogt, %31, %35 : vector<1x256xf32>
    %cst_14 = arith.constant 1.000000e+00 : f32
    %cst_15 = arith.constant 0.000000e+00 : f32
    %37 = vector.broadcast %cst_14 : f32 to vector<1x256xf32>
    %38 = vector.broadcast %cst_15 : f32 to vector<1x256xf32>
    %39 = arith.select %36, %37, %38 : vector<1x256xi1>, vector<1x256xf32>
    %cst_16 = arith.constant dense<0.000000e+00> : vector<1xf32>
    %40 = vector.multi_reduction <add>, %39, %cst_16 [1] : vector<1x256xf32> to vector<1xf32>
    %41 = vector.shape_cast %40 : vector<1xf32> to vector<1x1xf32>
    %cst_17 = arith.constant 0.000000e+00 : f32
    %42 = vector.broadcast %cst_17 : f32 to vector<1x256xf32>
    %43 = arith.select %36, %31, %42 : vector<1x256xi1>, vector<1x256xf32>
    %cst_18 = arith.constant dense<0.000000e+00> : vector<1xf32>
    %44 = vector.multi_reduction <add>, %43, %cst_18 [1] : vector<1x256xf32> to vector<1xf32>
    %45 = vector.shape_cast %44 : vector<1xf32> to vector<1x1xf32>
    %46 = tpu.iota {dimensions = array<i32: 1>} : vector<1x128xi32>
    %c0_i32 = arith.constant 0 : i32
    %47 = vector.broadcast %c0_i32 : i32 to vector<1x128xi32>
    %48 = arith.cmpi eq, %46, %47 : vector<1x128xi32>
    %cst_19 = arith.constant 0.000000e+00 : f32
    %49 = vector.shape_cast %41 : vector<1x1xf32> to vector<1x1xf32>
    %50 = vector.broadcast %49 : vector<1x1xf32> to vector<1x128xf32>
    %51 = vector.broadcast %cst_19 : f32 to vector<1x128xf32>
    %52 = arith.select %48, %50, %51 : vector<1x128xi1>, vector<1x128xf32>
    %c0_20 = arith.constant 0 : index
    %c0_21 = arith.constant 0 : index
    %c0_22 = arith.constant 0 : index
    %53 = vector.load %arg5[%c0_20, %c0_21, %c0_22] : memref<1x1x128xf32, #tpu.memory_space<vmem>>, vector<1x1x128xf32>
    %54 = vector.shape_cast %53 : vector<1x1x128xf32> to vector<1x128xf32>
    %55 = vector.shape_cast %52 : vector<1x128xf32> to vector<1x1x128xf32>
    tpu.vector_store %arg5[%c0_20, %c0_21, %c0_22], %55 {strides = array<i32>} : memref<1x1x128xf32, #tpu.memory_space<vmem>>, vector<1x1x128xf32>,
    %c0_i32_23 = arith.constant 0 : i32
    %56 = vector.broadcast %c0_i32_23 : i32 to vector<1x128xi32>
    %57 = arith.cmpi eq, %46, %56 : vector<1x128xi32>
    %cst_24 = arith.constant 0.000000e+00 : f32
    %58 = vector.shape_cast %45 : vector<1x1xf32> to vector<1x1xf32>
    %59 = vector.broadcast %58 : vector<1x1xf32> to vector<1x128xf32>
    %60 = vector.broadcast %cst_24 : f32 to vector<1x128xf32>
    %61 = arith.select %57, %59, %60 : vector<1x128xi1>, vector<1x128xf32>
    %c0_25 = arith.constant 0 : index
    %c0_26 = arith.constant 0 : index
    %c0_27 = arith.constant 0 : index
    %62 = vector.load %arg6[%c0_25, %c0_26, %c0_27] : memref<1x1x128xf32, #tpu.memory_space<vmem>>, vector<1x1x128xf32>
    %63 = vector.shape_cast %62 : vector<1x1x128xf32> to vector<1x128xf32>
    %64 = vector.shape_cast %61 : vector<1x128xf32> to vector<1x1x128xf32>
    tpu.vector_store %arg6[%c0_25, %c0_26, %c0_27], %64 {strides = array<i32>} : memref<1x1x128xf32, #tpu.memory_space<vmem>>, vector<1x1x128xf32>,
    return
  }
  func.func @transform_0(%arg0: i32, %arg1: i32) -> (i32, i32, i32) {
    %c0_i32 = arith.constant 0 : i32
    %c0_i32_0 = arith.constant 0 : i32
    return %arg0, %c0_i32, %arg1 : i32, i32, i32
  }
  func.func @transform_1(%arg0: i32, %arg1: i32) -> (i32, i32, i32) {
    %c0_i32 = arith.constant 0 : i32
    %c0_i32_0 = arith.constant 0 : i32
    return %arg0, %c0_i32, %arg1 : i32, i32, i32
  }
  func.func @transform_2(%arg0: i32, %arg1: i32) -> (i32, i32, i32) {
    %c0_i32 = arith.constant 0 : i32
    %c0_i32_0 = arith.constant 0 : i32
    return %arg0, %c0_i32, %arg1 : i32, i32, i32
  }
  func.func @transform_3(%arg0: i32, %arg1: i32) -> (i32, i32, i32) {
    %c0_i32 = arith.constant 0 : i32
    %c0_i32_0 = arith.constant 0 : i32
    return %arg0, %c0_i32, %arg1 : i32, i32, i32
  }
  func.func @transform_4(%arg0: i32, %arg1: i32) -> (i32, i32, i32) {
    %c0_i32 = arith.constant 0 : i32
    %c0_i32_0 = arith.constant 0 : i32
    return %arg0, %c0_i32, %arg1 : i32, i32, i32
  }
}

</mosaic_0001>

<llo_original>
// kernel: ohem_ce_loss.1
$region0: #{ohem_ce_loss.1}
  #allocation0 [shape = 'u32[]', space=smem, size = 0x4, offset = 0x4, fixed_abs, tag = 'smem constant byte address 0x4 - core index']
  #allocation1 [shape = 'u32[144,128]{1,0:T(1,128)}', space=vmem, size = 0x12000, scoped, tag = 'internal scratch']
  %s0 = inlined_call_operand.vmem [shape: f32[2,4,256], index: 0, kind: input, shape index: {}]
  %s1 = inlined_call_operand.vmem [shape: s32[2,1,256], index: 1, kind: input, shape index: {}]
  %s2 = inlined_call_operand.vmem [shape: f32[2,1,256], index: 2, kind: output, shape index: {0}]
  %s3 = inlined_call_operand.vmem [shape: f32[2,1,128], index: 3, kind: output, shape index: {1}]
  %s4 = inlined_call_operand.vmem [shape: f32[2,1,128], index: 4, kind: output, shape index: {2}]
  %5 = xla_tuple %s2, %s3, %s4
  %s6 = sld [smem:[#allocation0]]
  $region57: #{ohem_ce_loss.1} parent=0
    _
  %s8 = ssub.s32 1, %s6
  %s9 = scalar_select 0, %s8, %s6
  loop: start=0, step=1, limit=4
  $region2: #{ohem_ce_loss.1} parent=0 // loop_pre_header
    _
  $region3: #{ohem_ce_loss.1} parent=0 // loop_header
    %s11 = sphi 0, %s15
    %p12 = scmp.ge.s32.totalorder %s11, 4
    %s18 = sphi 0, %s30
    %s19 = sphi 0, %s26
    %s20 = sphi 0, %s18
    %s21 = sphi 0, %s19
    %s22 = sphi 0, %s20
    %s23 = sphi 0, %s21
    %s35 = sphi 0, %s37
    %s38 = sphi 0, %s35
    %s39 = sphi 0, %s38
    %s55 = sphi 0, %s39
    %s63 = sphi 0, %s65
    %s66 = sphi 0, %s63
    %s67 = sphi 0, %s66
    %s83 = sphi 0, %s67
    %s91 = sphi 0, %s93
    %s94 = sphi 0, %s91
    %s95 = sphi 0, %s94
    %s111 = sphi 0, %s95
    %s119 = sphi 0, %s121
    %s122 = sphi 0, %s119
    %s123 = sphi 0, %s122
    %s139 = sphi 0, %s123
    %s147 = sphi 0, %s149
    %s150 = sphi 0, %s147
    %s151 = sphi 0, %s150
    %s167 = sphi 0, %s151
  $region4: #{ohem_ce_loss.1} parent=0 // loop_header_branch
    %14 = sbr.rel (%p12) target = $region8
  $region5: #{ohem_ce_loss.1} parent=0 // loop_body
    %s16 = ssub.s32 %s11, 1
    %s17 = ssub.s32 %s11, 2
    %s24 = sadd.s32 1, %s19
    %p25 = scmp.ge.s32.totalorder %s24, 1
    %s26 = scalar_select %p25, 0, %s24
    %s27 = sadd.s32 1, %s18
    %s28 = scalar_select %p25, %s27, %s18
    %p29 = scmp.ge.s32.totalorder %s28, 2
    %s30 = scalar_select %p29, 0, %s28
    %s31 = ssub.s32 %s18, %s30
    %s32 = ssub.s32 %s19, %s26
    %s33 = sor.u32 %s31, %s32
    %p34 = scmp.eq.s32.totalorder %s33, 0
    %s36 = sadd.s32 %s35, 1
    %s37 = scalar_select %p34, %s35, %s36
    %p40 = pneg %p34
    %p41 = scmp.eq.s32.totalorder %s11, 1
    %p42 = por %p40, %p41
    %p43 = scmp.ne.s32.totalorder %s35, %s38
    %p44 = scmp.eq.s32.totalorder %s11, 0
    %p45 = por %p43, %p44
    %p46 = scmp.ne.s32.totalorder %s35, %s38
    %p47 = scmp.eq.s32.totalorder %s16, 1
    %p48 = por %p46, %p47
    %p49 = scmp.ne.s32.totalorder %s38, %s39
    %p50 = scmp.eq.s32.totalorder %s16, 0
    %p51 = por %p49, %p50
    %p52 = scmp.ne.s32.totalorder %s38, %s39
    %p53 = scmp.eq.s32.totalorder %s17, 1
    %p54 = por %p52, %p53
    %p56 = scmp.ne.s32.totalorder %s39, %s55
    %p57 = scmp.eq.s32.totalorder %s17, 0
    %p58 = por %p56, %p57
    %s59 = ssub.s32 %s18, %s30
    %s60 = ssub.s32 %s19, %s26
    %s61 = sor.u32 %s59, %s60
    %p62 = scmp.eq.s32.totalorder %s61, 0
    %s64 = sadd.s32 %s63, 1
    %s65 = scalar_select %p62, %s63, %s64
    %p68 = pneg %p62
    %p69 = scmp.eq.s32.totalorder %s11, 1
    %p70 = por %p68, %p69
    %p71 = scmp.ne.s32.totalorder %s63, %s66
    %p72 = scmp.eq.s32.totalorder %s11, 0
    %p73 = por %p71, %p72
    %p74 = scmp.ne.s32.totalorder %s63, %s66
    %p75 = scmp.eq.s32.totalorder %s16, 1
    %p76 = por %p74, %p75
    %p77 = scmp.ne.s32.totalorder %s66, %s67
    %p78 = scmp.eq.s32.totalorder %s16, 0
    %p79 = por %p77, %p78
    %p80 = scmp.ne.s32.totalorder %s66, %s67
    %p81 = scmp.eq.s32.totalorder %s17, 1
    %p82 = por %p80, %p81
    %p84 = scmp.ne.s32.totalorder %s67, %s83
    %p85 = scmp.eq.s32.totalorder %s17, 0
    %p86 = por %p84, %p85
    %s87 = ssub.s32 %s18, %s30
    %s88 = ssub.s32 %s19, %s26
    %s89 = sor.u32 %s87, %s88
    %p90 = scmp.eq.s32.totalorder %s89, 0
    %s92 = sadd.s32 %s91, 1
    %s93 = scalar_select %p90, %s91, %s92
    %p96 = pneg %p90
    %p97 = scmp.eq.s32.totalorder %s11, 1
    %p98 = por %p96, %p97
    %p99 = scmp.ne.s32.totalorder %s91, %s94
    %p100 = scmp.eq.s32.totalorder %s11, 0
    %p101 = por %p99, %p100
    %p102 = scmp.ne.s32.totalorder %s91, %s94
    %p103 = scmp.eq.s32.totalorder %s16, 1
    %p104 = por %p102, %p103
    %p105 = scmp.ne.s32.totalorder %s94, %s95
    %p106 = scmp.eq.s32.totalorder %s16, 0
    %p107 = por %p105, %p106
    %p108 = scmp.ne.s32.totalorder %s94, %s95
    %p109 = scmp.eq.s32.totalorder %s17, 1
    %p110 = por %p108, %p109
    %p112 = scmp.ne.s32.totalorder %s95, %s111
    %p113 = scmp.eq.s32.totalorder %s17, 0
    %p114 = por %p112, %p113
    %s115 = ssub.s32 %s18, %s30
    %s116 = ssub.s32 %s19, %s26
    %s117 = sor.u32 %s115, %s116
    %p118 = scmp.eq.s32.totalorder %s117, 0
    %s120 = sadd.s32 %s119, 1
    %s121 = scalar_select %p118, %s119, %s120
    %p124 = pneg %p118
    %p125 = scmp.eq.s32.totalorder %s11, 1
    %p126 = por %p124, %p125
    %p127 = scmp.ne.s32.totalorder %s119, %s122
    %p128 = scmp.eq.s32.totalorder %s11, 0
    %p129 = por %p127, %p128
    %p130 = scmp.ne.s32.totalorder %s119, %s122
    %p131 = scmp.eq.s32.totalorder %s16, 1
    %p132 = por %p130, %p131
    %p133 = scmp.ne.s32.totalorder %s122, %s123
    %p134 = scmp.eq.s32.totalorder %s16, 0
    %p135 = por %p133, %p134
    %p136 = scmp.ne.s32.totalorder %s122, %s123
    %p137 = scmp.eq.s32.totalorder %s17, 1
    %p138 = por %p136, %p137
    %p140 = scmp.ne.s32.totalorder %s123, %s139
    %p141 = scmp.eq.s32.totalorder %s17, 0
    %p142 = por %p140, %p141
    %s143 = ssub.s32 %s18, %s30
    %s144 = ssub.s32 %s19, %s26
    %s145 = sor.u32 %s143, %s144
    %p146 = scmp.eq.s32.totalorder %s145, 0
    %s148 = sadd.s32 %s147, 1
    %s149 = scalar_select %p146, %s147, %s148
    %p152 = pneg %p146
    %p153 = scmp.eq.s32.totalorder %s11, 1
    %p154 = por %p152, %p153
    %p155 = scmp.ne.s32.totalorder %s147, %s150
    %p156 = scmp.eq.s32.totalorder %s11, 0
    %p157 = por %p155, %p156
    %p158 = scmp.ne.s32.totalorder %s147, %s150
    %p159 = scmp.eq.s32.totalorder %s16, 1
    %p160 = por %p158, %p159
    %p161 = scmp.ne.s32.totalorder %s150, %s151
    %p162 = scmp.eq.s32.totalorder %s16, 0
    %p163 = por %p161, %p162
    %p164 = scmp.ne.s32.totalorder %s150, %s151
    %p165 = scmp.eq.s32.totalorder %s17, 1
    %p166 = por %p164, %p165
    %p168 = scmp.ne.s32.totalorder %s151, %s167
    %p169 = scmp.eq.s32.totalorder %s17, 0
    %p170 = por %p168, %p169
    %p171 = scmp.le.s32.totalorder 1, %s11
    %p172 = scmp.lt.s32.totalorder %s11, 3
    %p173 = pnand %p171, %p172
    %p174 = pneg %p173
    // Predicated region
    $region9: #{ohem_ce_loss.1} parent=5 // pred_check
      _
    $region10: #{ohem_ce_loss.1} parent=5 // pred_check_branch
      %176 = sbr.rel (%p173) target = $region12
    $region11: #{ohem_ce_loss.1} parent=5 // pred_region
      %s177 = ssub.s32 %s11, 1
    $region12: #{ohem_ce_loss.1} parent=5 // pred_fallthru
      _
    %p178 = scmp.lt.s32.totalorder %s11, 2
    // Predicated region
    $region13: #{ohem_ce_loss.1} parent=5 // pred_check
      %p179 = pneg %p178
    $region14: #{ohem_ce_loss.1} parent=5 // pred_check_branch
      %181 = sbr.rel (%p179) target = $region16
    $region15: #{ohem_ce_loss.1} parent=5 // pred_region
      // Predicated region
      $region17: #{ohem_ce_loss.1} parent=15 // pred_check
        %p182 = pneg %p45
      $region18: #{ohem_ce_loss.1} parent=15 // pred_check_branch
        %184 = sbr.rel (%p182) target = $region20
      $region19: #{ohem_ce_loss.1} parent=15 // pred_region
        %s185 = smul.u32 2, %s19
        %p186 = scmp.lt.s32.totalorder %s18, 1
        %s187 = scalar_select %p186, %s18, 1
        %p188 = scmp.lt.s32.totalorder %s185, 1
        %s189 = scalar_select %p188, %s185, 1
        %s190 = smul.addr %s187, 2
        %s191 = sadd.s32 %s189, %s190
        %s192 = smul.addr %s191, 4
        %s193 = scalar_lea.vmem %s0, %s192
        %s194 = smul.u32 2, %s19
      $region20: #{ohem_ce_loss.1} parent=15 // pred_fallthru
        _
      // Predicated region
      $region21: #{ohem_ce_loss.1} parent=15 // pred_check
        %p195 = pneg %p73
      $region22: #{ohem_ce_loss.1} parent=15 // pred_check_branch
        %197 = sbr.rel (%p195) target = $region24
      $region23: #{ohem_ce_loss.1} parent=15 // pred_region
        %s198 = smul.u32 2, %s19
        %p199 = scmp.lt.s32.totalorder %s18, 1
        %s200 = scalar_select %p199, %s18, 1
        %p201 = scmp.lt.s32.totalorder %s198, 1
        %s202 = scalar_select %p201, %s198, 1
        %s203 = smul.addr %s200, 2
        %s204 = sadd.s32 %s202, %s203
        %s205 = scalar_lea.vmem %s1, %s204
        %s206 = smul.u32 2, %s19
      $region24: #{ohem_ce_loss.1} parent=15 // pred_fallthru
        _
    $region16: #{ohem_ce_loss.1} parent=5 // pred_fallthru
      _
    %p207 = scmp.le.s32.totalorder 1, %s11
    %p208 = scmp.lt.s32.totalorder %s11, 3
    %p209 = pnand %p207, %p208
    %p210 = pneg %p209
    // Predicated region
    $region25: #{ohem_ce_loss.1} parent=5 // pred_check
      _
    $region26: #{ohem_ce_loss.1} parent=5 // pred_check_branch
      %212 = sbr.rel (%p209) target = $region28
    $region27: #{ohem_ce_loss.1} parent=5 // pred_region
      %s213 = ssub.s32 %s11, 1
      %s214 = smul.u32 2, %s21
      %p215 = scmp.lt.s32.totalorder %s20, 1
      %s216 = scalar_select %p215, %s20, 1
      %p217 = scmp.lt.s32.totalorder %s214, 1
      %s218 = scalar_select %p217, %s214, 1
      %s219 = smul.addr %s216, 2
      %s220 = sadd.s32 %s218, %s219
      %s221 = smul.addr %s220, 4
      %s222 = scalar_lea.vmem %s0, %s221
      %p223 = pneg %p51
      %p224 = pneg %p48
      %s225 = smul.u32 2, %s21
      %p226 = scmp.lt.s32.totalorder %s20, 1
      %s227 = scalar_select %p226, %s20, 1
      %p228 = scmp.lt.s32.totalorder %s225, 1
      %s229 = scalar_select %p228, %s225, 1
      %s230 = smul.addr %s227, 2
      %s231 = sadd.s32 %s229, %s230
      %s232 = scalar_lea.vmem %s1, %s231
      %p233 = pneg %p79
      %p234 = pneg %p76
      %p235 = pneg %p107
      %p236 = pneg %p104
      %s237 = smul.u32 2, %s21
      %p238 = scmp.lt.s32.totalorder %s20, 1
      %s239 = scalar_select %p238, %s20, 1
      %p240 = scmp.lt.s32.totalorder %s237, 1
      %s241 = scalar_select %p240, %s237, 1
      %s242 = smul.addr %s239, 2
      %s243 = sadd.s32 %s241, %s242
      %s244 = scalar_lea.vmem %s2, %s243
      %p245 = pneg %p135
      %p246 = pneg %p132
      %p247 = scmp.lt.s32.totalorder %s20, 1
      %s248 = scalar_select %p247, %s20, 1
      %p249 = scmp.lt.s32.totalorder %s21, 0
      %s250 = scalar_select %p249, %s21, 0
      %s251 = sadd.s32 %s250, %s248
      %s252 = scalar_lea.vmem %s3, %s251
      %p253 = pneg %p163
      %p254 = pneg %p160
      %p255 = scmp.lt.s32.totalorder %s20, 1
      %s256 = scalar_select %p255, %s20, 1
      %p257 = scmp.lt.s32.totalorder %s21, 0
      %s258 = scalar_select %p257, %s21, 0
      %s259 = sadd.s32 %s258, %s256
      %s260 = scalar_lea.vmem %s4, %s259
      %s261 = smul.u32 2, %s21
      %p262 = scmp.lt.s32.totalorder %s20, 1
      %s263 = scalar_select %p262, %s20, 1
      %p264 = scmp.lt.s32.totalorder %s261, 1
      %s265 = scalar_select %p264, %s261, 1
      %s266 = smul.addr %s263, 2
      %s267 = sadd.s32 %s265, %s266
      %s268 = smul.addr %s267, 4
      %s269 = scalar_lea.vmem %s0, %s268
      %s270 = smul.u32 2, %s21
      %s271 = smul.u32 2, %s21
      %p272 = scmp.lt.s32.totalorder %s20, 1
      %s273 = scalar_select %p272, %s20, 1
      %p274 = scmp.lt.s32.totalorder %s271, 1
      %s275 = scalar_select %p274, %s271, 1
      %s276 = smul.addr %s273, 2
      %s277 = sadd.s32 %s275, %s276
      %s278 = scalar_lea.vmem %s1, %s277
      %s279 = smul.u32 2, %s21
      %s280 = smul.u32 2, %s21
      %p281 = scmp.lt.s32.totalorder %s20, 1
      %s282 = scalar_select %p281, %s20, 1
      %p283 = scmp.lt.s32.totalorder %s280, 1
      %s284 = scalar_select %p283, %s280, 1
      %s285 = smul.addr %s282, 2
      %s286 = sadd.s32 %s284, %s285
      %s287 = scalar_lea.vmem %s2, %s286
      %s288 = smul.u32 2, %s21
      %p289 = scmp.lt.s32.totalorder %s20, 1
      %s290 = scalar_select %p289, %s20, 1
      %p291 = scmp.lt.s32.totalorder %s21, 0
      %s292 = scalar_select %p291, %s21, 0
      %s293 = sadd.s32 %s292, %s290
      %s294 = scalar_lea.vmem %s3, %s293
      %p295 = scmp.lt.s32.totalorder %s20, 1
      %s296 = scalar_select %p295, %s20, 1
      %p297 = scmp.lt.s32.totalorder %s21, 0
      %s298 = scalar_select %p297, %s21, 0
      %s299 = sadd.s32 %s298, %s296
      %s300 = scalar_lea.vmem %s4, %s299
      %v301 = vld [vmem:[%s269] sm:$0xff]
      %v302 = vld [vmem:[%s278] sm:$0x3]
      %v304 = vcombine.high %v301, %v301
      %vm306 = vcmask 1043456
      %v307 = vsel %vm306, %v301, -inf
      %v308 = vrot.slane %v307, 4
      %v309 = vmax.f32 %v307, %v308
      %v310 = vrot.slane %v309, 2
      %v311 = vmax.f32 %v309, %v310
      %v312 = vrot.slane %v311, 1
      %v313 = vmax.f32 %v311, %v312
      %v314 = vsel %vm306, %v304, -inf
      %v315 = vrot.slane %v314, 4
      %v316 = vmax.f32 %v314, %v315
      %v317 = vrot.slane %v316, 2
      %v318 = vmax.f32 %v316, %v317
      %v319 = vrot.slane %v318, 1
      %v320 = vmax.f32 %v318, %v319
      %v323 = vcombine.low %v313, %v320
      %v325 = vsub.f32 %v301, %v323
      %v326 = vmul.f32 %v325, 1.442695
      %v327 = vpow.pop %v326
      %v329 = vcombine.high %v327, %v327
      %v331 = vsel %vm306, %v327, 0.0
      %v332 = vrot.slane %v331, 4
      %v333 = vadd.f32 %v331, %v332
      %v334 = vrot.slane %v333, 2
      %v335 = vadd.f32 %v333, %v334
      %v336 = vrot.slane %v335, 1
      %v337 = vadd.f32 %v335, %v336
      %v338 = vsel %vm306, %v329, 0.0
      %v339 = vrot.slane %v338, 4
      %v340 = vadd.f32 %v338, %v339
      %v341 = vrot.slane %v340, 2
      %v342 = vadd.f32 %v340, %v341
      %v343 = vrot.slane %v342, 1
      %v344 = vadd.f32 %v342, %v343
      %v345 = vlaneseq
      %v346 = vshrl.u32 %v345, 7
      %v347 = vlaneseq
      %v348 = vshrl.u32 %v347, 7
      %v349 = vsub.s32 0, %v348
      %v350 = vrot.slane %v302, %v349
      %v351 = vlaneseq
      %v352 = vshrl.u32 %v351, 7
      %v353 = vsub.s32 1, %v352
      %v354 = vrot.slane %v302, %v353
      %vm355 = vcmp.eq.s32.totalorder %v346, %v350
      %vm356 = vcmp.eq.s32.totalorder %v346, %v354
      %v357 = vsel %vm355, %v301, 0.0
      %v358 = vsel %vm356, %v304, 0.0
      %v359 = vsel %vm306, %v357, 0.0
      %v360 = vrot.slane %v359, 4
      %v361 = vadd.f32 %v359, %v360
      %v362 = vrot.slane %v361, 2
      %v363 = vadd.f32 %v361, %v362
      %v364 = vrot.slane %v363, 1
      %v365 = vadd.f32 %v363, %v364
      %v366 = vsel %vm306, %v358, 0.0
      %v367 = vrot.slane %v366, 4
      %v368 = vadd.f32 %v366, %v367
      %v369 = vrot.slane %v368, 2
      %v370 = vadd.f32 %v368, %v369
      %v371 = vrot.slane %v370, 1
      %v372 = vadd.f32 %v370, %v371
      %v373 = vlog2.pop %v337
      %v374 = vmul.f32 %v373, 0.6931472
      %v375 = vlog2.pop %v344
      %v376 = vmul.f32 %v375, 0.6931472
      %v377 = vadd.f32 %v374, %v313
      %v378 = vadd.f32 %v376, %v320
      %v379 = vsub.f32 %v377, %v365
      %v380 = vsub.f32 %v378, %v372
      %v381 = vlaneseq
      %v382 = vand.u32 %v381, 127
      %v383 = vadd.s32 %v382, 128
      %s384 = smul.u32 %s21, 256
      %v385 = vstv %s384
      %v386 = vadd.s32 %v385, %v382
      %v387 = vadd.s32 %v385, %v383
      %vm388 = vcmp.lt.s32.totalorder %v386, 256
      %vm389 = vcmp.lt.s32.totalorder %v387, 256
      %vm390 = vcmp.ne.s32.totalorder %v302, 255
      %v391 = vsel %vm390, 1, 0
      %v392 = vlaneseq
      %v393 = vshrl.u32 %v392, 7
      %v394 = vsub.s32 0, %v393
      %v395 = vrot.slane %v391, %v394
      %v396 = vlaneseq
      %v397 = vshrl.u32 %v396, 7
      %v398 = vsub.s32 1, %v397
      %v399 = vrot.slane %v391, %v398
      %vm400 = vcmp.ne.s32.totalorder %v395, 0
      %vm401 = vcmp.ne.s32.totalorder %v399, 0
      %vm402 = vmand %vm388, %vm400
      %vm403 = vmand %vm389, %vm401
      %v404 = vsel %vm402, %v379, 0.0
      %v405 = vsel %vm403, %v380, 0.0
      %v408 = vcombine.low %v404, %v405
      %v410 = vunpack.c.l.s4 1966171168
      %v411 = vunpack.c.0.s8 %v410
      %v412 = vlaneseq
      %v413 = vshrl.u32 %v412, 7
      %v414 = vsub.s32 %v411, %v413
      %v415 = vrot.slane %v408, %v414
      %v417 = vunpack.c.l.s4 1966171168
      %v418 = vunpack.c.0.s8 %v417
      %v419 = vlaneseq
      %v420 = vshrl.u32 %v419, 7
      %v421 = vsub.s32 %v418, %v420
      %v422 = vrot.slane %v415, %v421
      %v424 = vlaneseq
      %vm425 = vcmp.ge.s32.totalorder %v424, 0
      %vm426 = vcmp.lt.s32.totalorder %v424, 256
      %vm427 = vmand %vm425, %vm426
      %428 = vst.msk [vmem:[%s287] sm:$0x3] %vm427, %v422
      %vm429 = vcmp.gt.f32.partialorder %v404, 0.35667494
      %vm430 = vcmp.gt.f32.partialorder %v405, 0.35667494
      %v431 = vsel %vm429, 1.0, 0.0
      %v432 = vsel %vm430, 1.0, 0.0
      %vm433 = vcmask 1040384
      %v434 = vsel %vm433, %v431, 0.0
      %v435 = vsel %vm433, %v432, 0.0
      %v436 = vadd.f32 %v434, %v435
      %437 = vadd.xlane.f32.xlu0 %v436
      %v438 = vpop.xlane.xlu0 %437
      %v439 = vsel %vm429, %v404, 0.0
      %v440 = vsel %vm430, %v405, 0.0
      %v441 = vsel %vm433, %v439, 0.0
      %v442 = vsel %vm433, %v440, 0.0
      %v443 = vadd.f32 %v441, %v442
      %444 = vadd.xlane.f32.xlu0 %v443
      %v445 = vpop.xlane.xlu0 %444
      %vm446 = vcmp.eq.s32.totalorder %v382, 0
      %v447 = vsel %vm446, %v438, 0.0
      %448 = vst [vmem:[%s294] sm:$0x1] %v447
      %v449 = vsel %vm446, %v445, 0.0
      %450 = vst [vmem:[%s300] sm:$0x1] %v449
      %s451 = smul.u32 2, %s21
      %p452 = scmp.lt.s32.totalorder %s20, 1
      %s453 = scalar_select %p452, %s20, 1
      %p454 = scmp.lt.s32.totalorder %s451, 1
      %s455 = scalar_select %p454, %s451, 1
      %s456 = smul.addr %s453, 2
      %s457 = sadd.s32 %s455, %s456
      %s458 = scalar_lea.vmem %s2, %s457
      %p459 = scmp.lt.s32.totalorder %s20, 1
      %s460 = scalar_select %p459, %s20, 1
      %p461 = scmp.lt.s32.totalorder %s21, 0
      %s462 = scalar_select %p461, %s21, 0
      %s463 = sadd.s32 %s462, %s460
      %s464 = scalar_lea.vmem %s3, %s463
      %p465 = scmp.lt.s32.totalorder %s20, 1
      %s466 = scalar_select %p465, %s20, 1
      %p467 = scmp.lt.s32.totalorder %s21, 0
      %s468 = scalar_select %p467, %s21, 0
      %s469 = sadd.s32 %s468, %s466
      %s470 = scalar_lea.vmem %s4, %s469
      // Predicated region
      $region29: #{ohem_ce_loss.1} parent=27 // pred_check
        %p471 = pneg %p104
      $region30: #{ohem_ce_loss.1} parent=27 // pred_check_branch
        %473 = sbr.rel (%p471) target = $region32
      $region31: #{ohem_ce_loss.1} parent=27 // pred_region
        %s474 = smul.u32 2, %s21
      $region32: #{ohem_ce_loss.1} parent=27 // pred_fallthru
        _
      // Predicated region
      $region33: #{ohem_ce_loss.1} parent=27 // pred_check
        %p475 = pneg %p132
      $region34: #{ohem_ce_loss.1} parent=27 // pred_check_branch
        %477 = sbr.rel (%p475) target = $region36
      $region35: #{ohem_ce_loss.1} parent=27 // pred_region
        _
      $region36: #{ohem_ce_loss.1} parent=27 // pred_fallthru
        _
      // Predicated region
      $region37: #{ohem_ce_loss.1} parent=27 // pred_check
        %p478 = pneg %p160
      $region38: #{ohem_ce_loss.1} parent=27 // pred_check_branch
        %480 = sbr.rel (%p478) target = $region40
      $region39: #{ohem_ce_loss.1} parent=27 // pred_region
        _
      $region40: #{ohem_ce_loss.1} parent=27 // pred_fallthru
        _
    $region28: #{ohem_ce_loss.1} parent=5 // pred_fallthru
      _
    %p481 = scmp.le.s32.totalorder 2, %s11
    // Predicated region
    $region41: #{ohem_ce_loss.1} parent=5 // pred_check
      %p482 = pneg %p481
    $region42: #{ohem_ce_loss.1} parent=5 // pred_check_branch
      %484 = sbr.rel (%p482) target = $region44
    $region43: #{ohem_ce_loss.1} parent=5 // pred_region
      %s485 = ssub.s32 %s11, 2
      // Predicated region
      $region45: #{ohem_ce_loss.1} parent=43 // pred_check
        %p486 = pneg %p110
      $region46: #{ohem_ce_loss.1} parent=43 // pred_check_branch
        %488 = sbr.rel (%p486) target = $region48
      $region47: #{ohem_ce_loss.1} parent=43 // pred_region
        %s489 = smul.u32 2, %s23
        %p490 = scmp.lt.s32.totalorder %s22, 1
        %s491 = scalar_select %p490, %s22, 1
        %p492 = scmp.lt.s32.totalorder %s489, 1
        %s493 = scalar_select %p492, %s489, 1
        %s494 = smul.addr %s491, 2
        %s495 = sadd.s32 %s493, %s494
        %s496 = scalar_lea.vmem %s2, %s495
      $region48: #{ohem_ce_loss.1} parent=43 // pred_fallthru
        _
      // Predicated region
      $region49: #{ohem_ce_loss.1} parent=43 // pred_check
        %p497 = pneg %p138
      $region50: #{ohem_ce_loss.1} parent=43 // pred_check_branch
        %499 = sbr.rel (%p497) target = $region52
      $region51: #{ohem_ce_loss.1} parent=43 // pred_region
        %p500 = scmp.lt.s32.totalorder %s22, 1
        %s501 = scalar_select %p500, %s22, 1
        %p502 = scmp.lt.s32.totalorder %s23, 0
        %s503 = scalar_select %p502, %s23, 0
        %s504 = sadd.s32 %s503, %s501
        %s505 = scalar_lea.vmem %s3, %s504
      $region52: #{ohem_ce_loss.1} parent=43 // pred_fallthru
        _
      // Predicated region
      $region53: #{ohem_ce_loss.1} parent=43 // pred_check
        %p506 = pneg %p166
      $region54: #{ohem_ce_loss.1} parent=43 // pred_check_branch
        %508 = sbr.rel (%p506) target = $region56
      $region55: #{ohem_ce_loss.1} parent=43 // pred_region
        %p509 = scmp.lt.s32.totalorder %s22, 1
        %s510 = scalar_select %p509, %s22, 1
        %p511 = scmp.lt.s32.totalorder %s23, 0
        %s512 = scalar_select %p511, %s23, 0
        %s513 = sadd.s32 %s512, %s510
        %s514 = scalar_lea.vmem %s4, %s513
      $region56: #{ohem_ce_loss.1} parent=43 // pred_fallthru
        _
    $region44: #{ohem_ce_loss.1} parent=5 // pred_fallthru
      _
  $region6: #{ohem_ce_loss.1} parent=0 // loop_footer
    %s15 = sadd.s32 1, %s11
  $region7: #{ohem_ce_loss.1} parent=0 // loop_footer_branch
    %10 = sbr.rel target = $region3
  $region8: #{ohem_ce_loss.1} parent=0 // loop_exit
    _

</llo_original>
